<compile_context>
chip_gen: v6e
topology: v6e:2x2x1
jax: 0.10.0
libtpu: 0.0.40
codegen_flags: <defaults>
</compile_context>

<pallas_src>
import functools

import jax
import jax.numpy as jnp
from jax import lax
from jax.experimental import pallas as pl
from jax.experimental.pallas import tpu as pltpu


def _round_up(x, m):
    return ((x + m - 1) // m) * m


def _pick_tile(total, unit, target):
    """Largest multiple of `unit` that divides `total` and is <= max(target, unit).

    `total` must already be a multiple of `unit`.
    """
    m = total // unit
    dmax = max(target // unit, 1)
    best = 1
    d = 1
    while d * d <= m:
        if m % d == 0:
            if d <= dmax:
                best = max(best, d)
            q = m // d
            if q <= dmax:
                best = max(best, q)
        d += 1
    return best * unit


def _exp_dtype_for(out_dtype):
    """bf16 exp on chips with a bf16 EUP/VPU path (v6e/v7x); f32 otherwise."""
    if jnp.dtype(out_dtype) != jnp.dtype(jnp.bfloat16):
        return jnp.float32
    try:
        kind = jax.devices()[0].device_kind.lower()
    except Exception:  # pragma: no cover - defensive
        kind = ""
    if "v5" in kind:  # v5e/v5p scalar names all contain "v5"; no bf16 EUP on v5e
        return jnp.float32
    return jnp.bfloat16


def hept_kernel(q_ref, kt_ref, qsq_ref, ksq_ref, o_ref, *, exp_dtype):
    # q_ref: (TQ, D), kt_ref: (D, TK), qsq_ref: (TQ, 1), ksq_ref: (1, TK)
    # MXU matmul in its natural (M,K)x(K,N) orientation, f32 accumulation.
    cs = lax.dot_general(
        q_ref[...], kt_ref[...], (((1,), (0,)), ((), ())),
        preferred_element_type=jnp.float32,
    )
    s = jnp.minimum(cs + qsq_ref[...] + ksq_ref[...], 0.0)   # VPU
    qk = jnp.exp(s.astype(exp_dtype))                        # EUP
    o_ref[...] = qk.astype(o_ref.dtype)


def hept_forward(query, key, *, tq=512, tk=1024, out_dtype=jnp.bfloat16):
    """query, key: (B, H, S, D) -> (B, H, S, Sk) in out_dtype (default bf16).

    Pass out_dtype=jnp.float32 for full-precision output (same math, 2x the
    HBM writeback).
    """
    B, H, S, D = query.shape
    Sk = key.shape[2]
    BH = B * H
    out_dtype = jnp.dtype(out_dtype)
    exp_dtype = _exp_dtype_for(out_dtype)

    # Minimal alignment padding; tiles chosen as divisors of the padded extents
    # (tq/tk are treated as upper bounds and rounded/validated here).
    S_pad = _round_up(S, 8)
    Sk_pad = _round_up(Sk, 128)
    TQ = _pick_tile(S_pad, 8, max(int(tq), 8))
    TK = _pick_tile(Sk_pad, 128, max(int(tk), 128))

    q = query.reshape(BH, S, D)
    k = key.reshape(BH, Sk, D)

    qf = q.astype(jnp.float32)
    kf = k.astype(jnp.float32)
    q_sq = -0.5 * jnp.sum(qf * qf, axis=-1, keepdims=True)          # (BH, S, 1)
    k_sq = (-0.5 * jnp.sum(kf * kf, axis=-1))[:, None, :]           # (BH, 1, Sk)
    kt = jnp.swapaxes(k, 1, 2)                                      # (BH, D, Sk)

    if S_pad != S:
        q = jnp.pad(q, ((0, 0), (0, S_pad - S), (0, 0)))
        q_sq = jnp.pad(q_sq, ((0, 0), (0, S_pad - S), (0, 0)))
    if Sk_pad != Sk:
        kt = jnp.pad(kt, ((0, 0), (0, 0), (0, Sk_pad - Sk)))
        k_sq = jnp.pad(k_sq, ((0, 0), (0, 0), (0, Sk_pad - Sk)))

    # k-tile axis last + "arbitrary": q tile / q norm stay resident across it.
    grid = (BH, S_pad // TQ, Sk_pad // TK)

    out = pl.pallas_call(
        functools.partial(hept_kernel, exp_dtype=exp_dtype),
        out_shape=jax.ShapeDtypeStruct((BH, S_pad, Sk_pad), out_dtype),
        grid_spec=pltpu.PrefetchScalarGridSpec(
            num_scalar_prefetch=0,
            grid=grid,
            in_specs=[
                pl.BlockSpec((pl.Squeezed(), TQ, D), lambda b, qi, ki: (b, qi, 0)),
                pl.BlockSpec((pl.Squeezed(), D, TK), lambda b, qi, ki: (b, 0, ki)),
                pl.BlockSpec((pl.Squeezed(), TQ, 1), lambda b, qi, ki: (b, qi, 0)),
                pl.BlockSpec((pl.Squeezed(), 1, TK), lambda b, qi, ki: (b, 0, ki)),
            ],
            out_specs=pl.BlockSpec((pl.Squeezed(), TQ, TK),
                                   lambda b, qi, ki: (b, qi, ki)),
        ),
        compiler_params=pltpu.CompilerParams(
            dimension_semantics=("parallel", "parallel", "arbitrary"),
            vmem_limit_bytes=32 * 1024 * 1024,
        ),
    )(q, kt, q_sq, k_sq)

    if S_pad != S or Sk_pad != Sk:
        out = out[:, :S, :Sk]
    return out.reshape(B, H, S, Sk)


def _reference(query, key):
    q_sq = -0.5 * jnp.sum(query ** 2, axis=-1, keepdims=True)
    k_sq = -0.5 * jnp.sum(key ** 2, axis=-1, keepdims=True)
    cs = jnp.einsum('...id,...jd->...ij', query, key)
    return jnp.exp(jnp.minimum(cs + q_sq + jnp.swapaxes(k_sq, -1, -2), 0.0))


if __name__ == "__main__":
    # Small shapes consistent with HEPT(n_heads, batch_size, seq_len, dim_per_head)
    n_heads, batch_size, seq_len, dim_per_head = 2, 2, 8, 16

    key0 = jax.random.PRNGKey(0)
    kq, kk = jax.random.split(key0)
    query = jax.random.normal(kq, (batch_size, n_heads, seq_len, dim_per_head),
                              dtype=jnp.float32)
    key_t = jax.random.normal(kk, (batch_size, n_heads, seq_len, dim_per_head),
                              dtype=jnp.float32)

    ref = _reference(query, key_t)

    # Default (bf16 output) path: math identical, output precision ~3 digits.
    out_bf16 = jax.block_until_ready(hept_forward(query, key_t))
    assert out_bf16.shape == (batch_size, n_heads, seq_len, seq_len)
    assert out_bf16.dtype == jnp.bfloat16
    assert jnp.allclose(out_bf16.astype(jnp.float32), ref, atol=2e-2, rtol=2e-2)

    # Full-precision opt-in path: must match the reference tightly.
    out_f32 = jax.block_until_ready(
        hept_forward(query, key_t, out_dtype=jnp.float32))
    assert out_f32.dtype == jnp.float32
    assert jnp.allclose(out_f32, ref, atol=1e-5, rtol=1e-5)

    # Multi-tile grid + ragged (non 8/128 aligned) sequence lengths.
    seq2 = 200
    kq2, kk2 = jax.random.split(jax.random.PRNGKey(1))
    q2 = jax.random.normal(kq2, (batch_size, n_heads, seq2, dim_per_head),
                           dtype=jnp.float32)
    k2 = jax.random.normal(kk2, (batch_size, n_heads, seq2, dim_per_head),
                           dtype=jnp.float32)
    out2 = jax.block_until_ready(
        hept_forward(q2, k2, tq=64, tk=128, out_dtype=jnp.float32))
    ref2 = _reference(q2, k2)
    assert out2.shape == (batch_size, n_heads, seq2, seq2)
    assert jnp.allclose(out2, ref2, atol=1e-5, rtol=1e-5)

    print("KERNEL_OK")
</pallas_src>

<mosaic_0001>
module attributes {stable_mosaic.version = 11 : i64} {
  func.func @hept_kernel(%arg0: i32, %arg1: i32, %arg2: i32, %arg3: memref<1x8x16xf32, #tpu.memory_space<vmem>>, %arg4: memref<1x16x128xf32, #tpu.memory_space<vmem>>, %arg5: memref<1x8x1xf32, #tpu.memory_space<vmem>>, %arg6: memref<1x1x128xf32, #tpu.memory_space<vmem>>, %arg7: memref<1x8x128xbf16, #tpu.memory_space<vmem>>) attributes {dimension_semantics = [#tpu.dimension_semantics<parallel>, #tpu.dimension_semantics<parallel>, #tpu.dimension_semantics<arbitrary>], iteration_bounds = array<i64: 4, 1, 1>, scalar_prefetch = 0 : i64, scratch_operands = 0 : i64, tpu.core_type = #tpu.core_type<tc>, window_params = [{transform_indices = @transform_0, window_bounds = array<i64: 1, 8, 16>}, {transform_indices = @transform_1, window_bounds = array<i64: 1, 16, 128>}, {transform_indices = @transform_2, window_bounds = array<i64: 1, 8, 1>}, {transform_indices = @transform_3, window_bounds = array<i64: 1, 1, 128>}, {transform_indices = @transform_4, window_bounds = array<i64: 1, 8, 128>}]} {
    %c0 = arith.constant 0 : index
    %c0_0 = arith.constant 0 : index
    %c0_1 = arith.constant 0 : index
    %0 = vector.load %arg3[%c0, %c0_0, %c0_1] : memref<1x8x16xf32, #tpu.memory_space<vmem>>, vector<1x8x16xf32>
    %1 = vector.shape_cast %0 : vector<1x8x16xf32> to vector<8x16xf32>
    %c0_2 = arith.constant 0 : index
    %c0_3 = arith.constant 0 : index
    %c0_4 = arith.constant 0 : index
    %2 = vector.load %arg4[%c0_2, %c0_3, %c0_4] : memref<1x16x128xf32, #tpu.memory_space<vmem>>, vector<1x16x128xf32>
    %3 = vector.shape_cast %2 : vector<1x16x128xf32> to vector<16x128xf32>
    %cst = arith.constant dense<0.000000e+00> : vector<8x128xf32>
    %4 = tpu.matmul %1, %3, %cst {dimension_numbers = #tpu.dot_dimension_numbers<[1], [0], [0], [1], [0, 0, 1, 1], [], []>} : vector<8x16xf32>, vector<16x128xf32>, vector<8x128xf32> -> vector<8x128xf32>
    %c0_5 = arith.constant 0 : index
    %c0_6 = arith.constant 0 : index
    %c0_7 = arith.constant 0 : index
    %5 = vector.load %arg5[%c0_5, %c0_6, %c0_7] : memref<1x8x1xf32, #tpu.memory_space<vmem>>, vector<1x8x1xf32>
    %6 = vector.shape_cast %5 : vector<1x8x1xf32> to vector<8x1xf32>
    %7 = vector.broadcast %6 : vector<8x1xf32> to vector<8x128xf32>
    %8 = arith.addf %4, %7 : vector<8x128xf32>
    %c0_8 = arith.constant 0 : index
    %c0_9 = arith.constant 0 : index
    %c0_10 = arith.constant 0 : index
    %9 = vector.load %arg6[%c0_8, %c0_9, %c0_10] : memref<1x1x128xf32, #tpu.memory_space<vmem>>, vector<1x1x128xf32>
    %10 = vector.shape_cast %9 : vector<1x1x128xf32> to vector<1x128xf32>
    %11 = vector.broadcast %10 : vector<1x128xf32> to vector<8x128xf32>
    %12 = arith.addf %8, %11 : vector<8x128xf32>
    %cst_11 = arith.constant 0.000000e+00 : f32
    %13 = vector.broadcast %cst_11 : f32 to vector<8x128xf32>
    %14 = arith.minimumf %12, %13 : vector<8x128xf32>
    %15 = arith.truncf %14 : vector<8x128xf32> to vector<8x128xbf16>
    %16 = math.exp %15 : vector<8x128xbf16>
    %c0_12 = arith.constant 0 : index
    %c0_13 = arith.constant 0 : index
    %c0_14 = arith.constant 0 : index
    %17 = vector.load %arg7[%c0_12, %c0_13, %c0_14] : memref<1x8x128xbf16, #tpu.memory_space<vmem>>, vector<1x8x128xbf16>
    %18 = vector.shape_cast %17 : vector<1x8x128xbf16> to vector<8x128xbf16>
    %19 = vector.shape_cast %16 : vector<8x128xbf16> to vector<1x8x128xbf16>
    tpu.vector_store %arg7[%c0_12, %c0_13, %c0_14], %19 {strides = array<i32>} : memref<1x8x128xbf16, #tpu.memory_space<vmem>>, vector<1x8x128xbf16>,
    return
  }
  func.func @transform_0(%arg0: i32, %arg1: i32, %arg2: i32) -> (i32, i32, i32) {
    %c0_i32 = arith.constant 0 : i32
    %c0_i32_0 = arith.constant 0 : i32
    return %arg0, %arg1, %c0_i32 : i32, i32, i32
  }
  func.func @transform_1(%arg0: i32, %arg1: i32, %arg2: i32) -> (i32, i32, i32) {
    %c0_i32 = arith.constant 0 : i32
    %c0_i32_0 = arith.constant 0 : i32
    return %arg0, %c0_i32, %arg2 : i32, i32, i32
  }
  func.func @transform_2(%arg0: i32, %arg1: i32, %arg2: i32) -> (i32, i32, i32) {
    %c0_i32 = arith.constant 0 : i32
    %c0_i32_0 = arith.constant 0 : i32
    return %arg0, %arg1, %c0_i32 : i32, i32, i32
  }
  func.func @transform_3(%arg0: i32, %arg1: i32, %arg2: i32) -> (i32, i32, i32) {
    %c0_i32 = arith.constant 0 : i32
    %c0_i32_0 = arith.constant 0 : i32
    return %arg0, %c0_i32, %arg2 : i32, i32, i32
  }
  func.func @transform_4(%arg0: i32, %arg1: i32, %arg2: i32) -> (i32, i32, i32) {
    %c0_i32 = arith.constant 0 : i32
    return %arg0, %arg1, %arg2 : i32, i32, i32
  }
}

</mosaic_0001>

<llo_original>
// kernel: tpu_custom_call.1
$region0: #{tpu_custom_call.1}
  #allocation0 [shape = 'u32[]', space=smem, size = 0x4, offset = 0x4, fixed_abs, tag = 'smem constant byte address 0x4 - core index']
  #allocation1 [shape = 'u32[144,128]{1,0:T(1,128)}', space=vmem, size = 0x12000, scoped, tag = 'internal scratch']
  %s0 = inlined_call_operand.vmem [shape: f32[4,8,16], index: 0, kind: input, shape index: {}]
  %s1 = inlined_call_operand.hbm [shape: f32[4,16,128], index: 1, kind: input, shape index: {}]
  %s2 = inlined_call_operand.vmem [shape: f32[4,8,1], index: 2, kind: input, shape index: {}]
  %s3 = inlined_call_operand.vmem [shape: f32[4,1,128], index: 3, kind: input, shape index: {}]
  %s4 = inlined_call_operand.hbm [shape: bf16[4,8,128], index: 4, kind: output, shape index: {}]
  %s5 = sld [smem:[#allocation0]]
  $region53: #{tpu_custom_call.1} parent=0
    _
  %s7 = ssub.s32 1, %s5
  %s8 = scalar_select 0, %s7, %s5
  $region1: #{tpu_custom_call.1} parent=0
    #allocation2 [shape = 'u8[16384]{0}', space=vmem, size = 0x4000, scoped, tag = 'input window, operand 1']
    #allocation3 [shape = 's32[2]{0}', space=sflag, size = 0x8, scoped, tag = 'scoped memory for tpu_custom_call.1']
    #allocation4 [shape = 's32[2]{0}', space=sflag, size = 0x8, scoped, tag = 'scoped memory for tpu_custom_call.1']
    #allocation5 [shape = 'u8[4096]{0}', space=vmem, size = 0x1000, scoped, tag = 'output window, operand 0']
    %9 = vsyncpa [#allocation3], 0
    %s10 = scalar_lea.sflag [#allocation3], 1
    %11 = vsyncpa %s10, 0
    %12 = vsyncpa [#allocation4], 0
    %s13 = scalar_lea.sflag [#allocation4], 1
    %14 = vsyncpa %s13, 0
    loop: start=0, step=1, limit=6
    $region2: #{tpu_custom_call.1} parent=1 // loop_pre_header
      _
    $region3: #{tpu_custom_call.1} parent=1 // loop_header
      %s16 = sphi 0, %s20
      %p17 = scmp.ge.s32.totalorder %s16, 6
      %s23 = sphi 0, %s42
      %s24 = sphi 0, %s38
      %s25 = sphi 0, %s34
      %s26 = sphi 0, %s23
      %s27 = sphi 0, %s24
      %s28 = sphi 0, %s25
      %s29 = sphi 0, %s26
      %s30 = sphi 0, %s27
      %s31 = sphi 0, %s28
      %s47 = sphi 0, %s49
      %s50 = sphi 0, %s47
      %s51 = sphi 0, %s50
      %s67 = sphi 0, %s51
      %s75 = sphi 0, %s77
      %s78 = sphi 0, %s75
      %s79 = sphi 0, %s78
      %s95 = sphi 0, %s79
      %s103 = sphi 0, %s105
      %s106 = sphi 0, %s103
      %s107 = sphi 0, %s106
      %s123 = sphi 0, %s107
      %s131 = sphi 0, %s133
      %s134 = sphi 0, %s131
      %s135 = sphi 0, %s134
      %s151 = sphi 0, %s135
      %s161 = sphi 0, %s163
      %s164 = sphi 0, %s161
      %s165 = sphi 0, %s164
      %s181 = sphi 0, %s165
    $region4: #{tpu_custom_call.1} parent=1 // loop_header_branch
      %19 = sbr.rel (%p17) target = $region8
    $region5: #{tpu_custom_call.1} parent=1 // loop_body
      %s21 = ssub.s32 %s16, 1
      %s22 = ssub.s32 %s16, 2
      %s32 = sadd.s32 1, %s25
      %p33 = scmp.ge.s32.totalorder %s32, 1
      %s34 = scalar_select %p33, 0, %s32
      %s35 = sadd.s32 1, %s24
      %s36 = scalar_select %p33, %s35, %s24
      %p37 = scmp.ge.s32.totalorder %s36, 1
      %s38 = scalar_select %p37, 0, %s36
      %s39 = sadd.s32 1, %s23
      %s40 = scalar_select %p37, %s39, %s23
      %p41 = scmp.ge.s32.totalorder %s40, 4
      %s42 = scalar_select %p41, 0, %s40
      %s43 = ssub.s32 %s23, %s42
      %s44 = ssub.s32 %s24, %s38
      %s45 = sor.u32 %s43, %s44
      %p46 = scmp.eq.s32.totalorder %s45, 0
      %s48 = sadd.s32 %s47, 1
      %s49 = scalar_select %p46, %s47, %s48
      %p52 = pneg %p46
      %p53 = scmp.eq.s32.totalorder %s16, 3
      %p54 = por %p52, %p53
      %p55 = scmp.ne.s32.totalorder %s47, %s50
      %p56 = scmp.eq.s32.totalorder %s16, 0
      %p57 = por %p55, %p56
      %p58 = scmp.ne.s32.totalorder %s47, %s50
      %p59 = scmp.eq.s32.totalorder %s21, 3
      %p60 = por %p58, %p59
      %p61 = scmp.ne.s32.totalorder %s50, %s51
      %p62 = scmp.eq.s32.totalorder %s21, 0
      %p63 = por %p61, %p62
      %p64 = scmp.ne.s32.totalorder %s50, %s51
      %p65 = scmp.eq.s32.totalorder %s22, 3
      %p66 = por %p64, %p65
      %p68 = scmp.ne.s32.totalorder %s51, %s67
      %p69 = scmp.eq.s32.totalorder %s22, 0
      %p70 = por %p68, %p69
      %s71 = ssub.s32 %s23, %s42
      %s72 = ssub.s32 %s25, %s34
      %s73 = sor.u32 %s71, %s72
      %p74 = scmp.eq.s32.totalorder %s73, 0
      %s76 = sadd.s32 %s75, 1
      %s77 = scalar_select %p74, %s75, %s76
      %p80 = pneg %p74
      %p81 = scmp.eq.s32.totalorder %s16, 3
      %p82 = por %p80, %p81
      %p83 = scmp.ne.s32.totalorder %s75, %s78
      %p84 = scmp.eq.s32.totalorder %s16, 0
      %p85 = por %p83, %p84
      %p86 = scmp.ne.s32.totalorder %s75, %s78
      %p87 = scmp.eq.s32.totalorder %s21, 3
      %p88 = por %p86, %p87
      %p89 = scmp.ne.s32.totalorder %s78, %s79
      %p90 = scmp.eq.s32.totalorder %s21, 0
      %p91 = por %p89, %p90
      %p92 = scmp.ne.s32.totalorder %s78, %s79
      %p93 = scmp.eq.s32.totalorder %s22, 3
      %p94 = por %p92, %p93
      %p96 = scmp.ne.s32.totalorder %s79, %s95
      %p97 = scmp.eq.s32.totalorder %s22, 0
      %p98 = por %p96, %p97
      %s99 = ssub.s32 %s23, %s42
      %s100 = ssub.s32 %s24, %s38
      %s101 = sor.u32 %s99, %s100
      %p102 = scmp.eq.s32.totalorder %s101, 0
      %s104 = sadd.s32 %s103, 1
      %s105 = scalar_select %p102, %s103, %s104
      %p108 = pneg %p102
      %p109 = scmp.eq.s32.totalorder %s16, 3
      %p110 = por %p108, %p109
      %p111 = scmp.ne.s32.totalorder %s103, %s106
      %p112 = scmp.eq.s32.totalorder %s16, 0
      %p113 = por %p111, %p112
      %p114 = scmp.ne.s32.totalorder %s103, %s106
      %p115 = scmp.eq.s32.totalorder %s21, 3
      %p116 = por %p114, %p115
      %p117 = scmp.ne.s32.totalorder %s106, %s107
      %p118 = scmp.eq.s32.totalorder %s21, 0
      %p119 = por %p117, %p118
      %p120 = scmp.ne.s32.totalorder %s106, %s107
      %p121 = scmp.eq.s32.totalorder %s22, 3
      %p122 = por %p120, %p121
      %p124 = scmp.ne.s32.totalorder %s107, %s123
      %p125 = scmp.eq.s32.totalorder %s22, 0
      %p126 = por %p124, %p125
      %s127 = ssub.s32 %s23, %s42
      %s128 = ssub.s32 %s25, %s34
      %s129 = sor.u32 %s127, %s128
      %p130 = scmp.eq.s32.totalorder %s129, 0
      %s132 = sadd.s32 %s131, 1
      %s133 = scalar_select %p130, %s131, %s132
      %p136 = pneg %p130
      %p137 = scmp.eq.s32.totalorder %s16, 3
      %p138 = por %p136, %p137
      %p139 = scmp.ne.s32.totalorder %s131, %s134
      %p140 = scmp.eq.s32.totalorder %s16, 0
      %p141 = por %p139, %p140
      %p142 = scmp.ne.s32.totalorder %s131, %s134
      %p143 = scmp.eq.s32.totalorder %s21, 3
      %p144 = por %p142, %p143
      %p145 = scmp.ne.s32.totalorder %s134, %s135
      %p146 = scmp.eq.s32.totalorder %s21, 0
      %p147 = por %p145, %p146
      %p148 = scmp.ne.s32.totalorder %s134, %s135
      %p149 = scmp.eq.s32.totalorder %s22, 3
      %p150 = por %p148, %p149
      %p152 = scmp.ne.s32.totalorder %s135, %s151
      %p153 = scmp.eq.s32.totalorder %s22, 0
      %p154 = por %p152, %p153
      %s155 = ssub.s32 %s23, %s42
      %s156 = ssub.s32 %s24, %s38
      %s157 = sor.u32 %s155, %s156
      %s158 = ssub.s32 %s25, %s34
      %s159 = sor.u32 %s157, %s158
      %p160 = scmp.eq.s32.totalorder %s159, 0
      %s162 = sadd.s32 %s161, 1
      %s163 = scalar_select %p160, %s161, %s162
      %p166 = pneg %p160
      %p167 = scmp.eq.s32.totalorder %s16, 3
      %p168 = por %p166, %p167
      %p169 = scmp.ne.s32.totalorder %s161, %s164
      %p170 = scmp.eq.s32.totalorder %s16, 0
      %p171 = por %p169, %p170
      %p172 = scmp.ne.s32.totalorder %s161, %s164
      %p173 = scmp.eq.s32.totalorder %s21, 3
      %p174 = por %p172, %p173
      %p175 = scmp.ne.s32.totalorder %s164, %s165
      %p176 = scmp.eq.s32.totalorder %s21, 0
      %p177 = por %p175, %p176
      %p178 = scmp.ne.s32.totalorder %s164, %s165
      %p179 = scmp.eq.s32.totalorder %s22, 3
      %p180 = por %p178, %p179
      %p182 = scmp.ne.s32.totalorder %s165, %s181
      %p183 = scmp.eq.s32.totalorder %s22, 0
      %p184 = por %p182, %p183
      %p185 = scmp.le.s32.totalorder 1, %s16
      %p186 = scmp.lt.s32.totalorder %s16, 5
      %p187 = pnand %p185, %p186
      %p188 = pneg %p187
      // Predicated region
      $region9: #{tpu_custom_call.1} parent=5 // pred_check
        _
      $region10: #{tpu_custom_call.1} parent=5 // pred_check_branch
        %190 = sbr.rel (%p187) target = $region12
      $region11: #{tpu_custom_call.1} parent=5 // pred_region
        %s191 = ssub.s32 %s16, 1
      $region12: #{tpu_custom_call.1} parent=5 // pred_fallthru
        _
      %p192 = scmp.lt.s32.totalorder %s16, 4
      // Predicated region
      $region13: #{tpu_custom_call.1} parent=5 // pred_check
        %p193 = pneg %p192
      $region14: #{tpu_custom_call.1} parent=5 // pred_check_branch
        %195 = sbr.rel (%p193) target = $region16
      $region15: #{tpu_custom_call.1} parent=5 // pred_region
        // Predicated region
        $region17: #{tpu_custom_call.1} parent=15 // pred_check
          %p196 = pneg %p57
        $region18: #{tpu_custom_call.1} parent=15 // pred_check_branch
          %198 = sbr.rel (%p196) target = $region20
        $region19: #{tpu_custom_call.1} parent=15 // pred_region
          %p199 = scmp.lt.s32.totalorder %s23, 3
          %s200 = scalar_select %p199, %s23, 3
          %p201 = scmp.lt.s32.totalorder %s24, 0
          %s202 = scalar_select %p201, %s24, 0
          %s203 = sadd.s32 %s202, %s200
          %s204 = smul.addr %s203, 8
          %s205 = scalar_lea.vmem %s0, %s204
        $region20: #{tpu_custom_call.1} parent=15 // pred_fallthru
          _
        // Predicated region
        $region21: #{tpu_custom_call.1} parent=15 // pred_check
          %p206 = pneg %p85
        $region22: #{tpu_custom_call.1} parent=15 // pred_check_branch
          %208 = sbr.rel (%p206) target = $region24
        $region23: #{tpu_custom_call.1} parent=15 // pred_region
          %s209 = sand.u32 %s75, 1
          %s210 = scalar_lea.sflag [#allocation3], %s209
          %s211 = sand.u32 %s75, 1
          %s212 = smul.addr %s211, 16
          %s213 = scalar_lea.vmem [#allocation2], %s212
          %s215 = ssub.s32 256, 256
          %216 = vsyncadd %s210, %s215
          %s217 = smul.addr %s23, 2
          %s218 = sadd.s32 %s25, %s217
          %s219 = smul.addr %s218, 128
          %s220 = scalar_lea.hbm %s1, %s219
          %s221 = sshll.u32 %s213, 4
          %s222 = int_to_ptr.vmem [resolvable:$true] %s221
          %227 = dma.hbm_to_vmem [thread:$0]  %s220, 256, %s222, %s210, 128, 128, 8
        $region24: #{tpu_custom_call.1} parent=15 // pred_fallthru
          _
        // Predicated region
        $region25: #{tpu_custom_call.1} parent=15 // pred_check
          %p228 = pneg %p113
        $region26: #{tpu_custom_call.1} parent=15 // pred_check_branch
          %230 = sbr.rel (%p228) target = $region28
        $region27: #{tpu_custom_call.1} parent=15 // pred_region
          %p231 = scmp.lt.s32.totalorder %s23, 3
          %s232 = scalar_select %p231, %s23, 3
          %p233 = scmp.lt.s32.totalorder %s24, 0
          %s234 = scalar_select %p233, %s24, 0
          %s235 = sadd.s32 %s234, %s232
          %s236 = smul.addr %s235, 8
          %s237 = scalar_lea.vmem %s2, %s236
        $region28: #{tpu_custom_call.1} parent=15 // pred_fallthru
          _
        // Predicated region
        $region29: #{tpu_custom_call.1} parent=15 // pred_check
          %p238 = pneg %p141
        $region30: #{tpu_custom_call.1} parent=15 // pred_check_branch
          %240 = sbr.rel (%p238) target = $region32
        $region31: #{tpu_custom_call.1} parent=15 // pred_region
          %p241 = scmp.lt.s32.totalorder %s23, 3
          %s242 = scalar_select %p241, %s23, 3
          %p243 = scmp.lt.s32.totalorder %s25, 0
          %s244 = scalar_select %p243, %s25, 0
          %s245 = sadd.s32 %s244, %s242
          %s246 = scalar_lea.vmem %s3, %s245
        $region32: #{tpu_custom_call.1} parent=15 // pred_fallthru
          _
      $region16: #{tpu_custom_call.1} parent=5 // pred_fallthru
        _
      %p247 = scmp.le.s32.totalorder 1, %s16
      %p248 = scmp.lt.s32.totalorder %s16, 5
      %p249 = pnand %p247, %p248
      %p250 = pneg %p249
      // Predicated region
      $region33: #{tpu_custom_call.1} parent=5 // pred_check
        _
      $region34: #{tpu_custom_call.1} parent=5 // pred_check_branch
        %252 = sbr.rel (%p249) target = $region36
      $region35: #{tpu_custom_call.1} parent=5 // pred_region
        %s253 = ssub.s32 %s16, 1
        %s254 = sand.u32 %s78, 1
        %s255 = scalar_lea.sflag [#allocation3], %s254
        %s256 = sand.u32 %s78, 1
        %s257 = smul.addr %s256, 16
        %s258 = scalar_lea.vmem [#allocation2], %s257
        // Predicated region
        $region37: #{tpu_custom_call.1} parent=35 // pred_check
          %p259 = pneg %p91
        $region38: #{tpu_custom_call.1} parent=35 // pred_check_branch
          %261 = sbr.rel (%p259) target = $region40
        $region39: #{tpu_custom_call.1} parent=35 // pred_region
          %262 = dma.done %s255, 256
        $region40: #{tpu_custom_call.1} parent=35 // pred_fallthru
          _
        %p263 = scmp.lt.s32.totalorder %s26, 3
        %s264 = scalar_select %p263, %s26, 3
        %p265 = scmp.lt.s32.totalorder %s27, 0
        %s266 = scalar_select %p265, %s27, 0
        %s267 = sadd.s32 %s266, %s264
        %s268 = smul.addr %s267, 8
        %s269 = scalar_lea.vmem %s0, %s268
        %p270 = pneg %p63
        %p271 = pneg %p60
        %s272 = sand.u32 %s78, 1
        %s273 = scalar_lea.sflag [#allocation3], %s272
        %s274 = sand.u32 %s78, 1
        %s275 = smul.addr %s274, 16
        %s276 = scalar_lea.vmem [#allocation2], %s275
        %p277 = pneg %p91
        %p278 = pneg %p88
        %p279 = scmp.lt.s32.totalorder %s26, 3
        %s280 = scalar_select %p279, %s26, 3
        %p281 = scmp.lt.s32.totalorder %s27, 0
        %s282 = scalar_select %p281, %s27, 0
        %s283 = sadd.s32 %s282, %s280
        %s284 = smul.addr %s283, 8
        %s285 = scalar_lea.vmem %s2, %s284
        %p286 = pneg %p119
        %p287 = pneg %p116
        %p288 = scmp.lt.s32.totalorder %s26, 3
        %s289 = scalar_select %p288, %s26, 3
        %p290 = scmp.lt.s32.totalorder %s28, 0
        %s291 = scalar_select %p290, %s28, 0
        %s292 = sadd.s32 %s291, %s289
        %s293 = scalar_lea.vmem %s3, %s292
        %p294 = pneg %p147
        %p295 = pneg %p144
        %p296 = pneg %p177
        %p297 = pneg %p174
        %s298 = sand.u32 %s164, 1
        %s299 = scalar_lea.sflag [#allocation4], %s298
        %s300 = sand.u32 %s164, 1
        %s301 = smul.addr %s300, 4
        %s302 = scalar_lea.vmem [#allocation5], %s301
        %p303 = scmp.lt.s32.totalorder %s26, 3
        %s304 = scalar_select %p303, %s26, 3
        %p305 = scmp.lt.s32.totalorder %s27, 0
        %s306 = scalar_select %p305, %s27, 0
        %s307 = sadd.s32 %s306, %s304
        %s308 = smul.addr %s307, 8
        %s309 = scalar_lea.vmem %s0, %s308
        %p310 = scmp.lt.s32.totalorder %s26, 3
        %s311 = scalar_select %p310, %s26, 3
        %p312 = scmp.lt.s32.totalorder %s27, 0
        %s313 = scalar_select %p312, %s27, 0
        %s314 = sadd.s32 %s313, %s311
        %s315 = smul.addr %s314, 8
        %s316 = scalar_lea.vmem %s2, %s315
        %p317 = scmp.lt.s32.totalorder %s26, 3
        %s318 = scalar_select %p317, %s26, 3
        %p319 = scmp.lt.s32.totalorder %s28, 0
        %s320 = scalar_select %p319, %s28, 0
        %s321 = sadd.s32 %s320, %s318
        %s322 = scalar_lea.vmem %s3, %s321
        %v323 = vld [vmem:[%s309] sm:$0xff]
        %v324 = vld [vmem:[%s258] sm:$0xff]
        %v325 = vld [vmem:[%s258 + $0x8] sm:$0xff]
        %v326 = vld [vmem:[%s316] sm:$0xff]
        %328 = vset.pattern.permute.xlu0 0
        %329 = vperm.xlu0 %328, %v326
        %v330 = vpop.permute.xlu0 %329
        %vm332 = vcmask 130048
        %v334 = vsel %vm332, %v323, 0
        %336 = vmatprep.subr.mxu0 0.0
        %337 = vmatpush1.msra.mxu0 0.0
        %338 = vmatprep.subr.mxu0 0.0
        %339 = vmatpush1.msra.mxu0 0.0
        %340 = vmatprep.subr.mxu0 0.0
        %341 = vmatpush1.msra.mxu0 0.0
        %342 = vmatprep.subr.mxu0 0.0
        %343 = vmatpush1.msra.mxu0 0.0
        %344 = vmatprep.subr.mxu0 0.0
        %345 = vmatpush1.msra.mxu0 0.0
        %346 = vmatprep.subr.mxu0 0.0
        %347 = vmatpush1.msra.mxu0 0.0
        %348 = vmatprep.subr.mxu0 0.0
        %349 = vmatpush1.msra.mxu0 0.0
        %350 = vmatprep.subr.mxu0 0.0
        %351 = vmatpush1.msra.mxu0 0.0
        %352 = vmatprep.subr.mxu0 0.0
        %353 = vmatpush1.msra.mxu0 0.0
        %354 = vmatprep.subr.mxu0 0.0
        %355 = vmatpush1.msra.mxu0 0.0
        %356 = vmatprep.subr.mxu0 0.0
        %357 = vmatpush1.msra.mxu0 0.0
        %358 = vmatprep.subr.mxu0 0.0
        %359 = vmatpush1.msra.mxu0 0.0
        %360 = vmatprep.subr.mxu0 0.0
        %361 = vmatpush1.msra.mxu0 0.0
        %362 = vmatprep.subr.mxu0 0.0
        %363 = vmatpush1.msra.mxu0 0.0
        %364 = vmatprep.subr.mxu0 0.0
        %365 = vmatpush1.msra.mxu0 %v325
        %366 = vmatprep.subr.mxu0 0.0
        %367 = vmatpush1.msra.mxu0 %v324
        %368 = vmatprep.subr.mxu0 0.0
        %369 = vmatpush2.msra.mxu0 0.0
        %370 = vmatprep.subr.mxu0 0.0
        %371 = vmatpush2.msra.mxu0 0.0
        %372 = vmatprep.subr.mxu0 0.0
        %373 = vmatpush2.msra.mxu0 0.0
        %374 = vmatprep.subr.mxu0 0.0
        %375 = vmatpush2.msra.mxu0 0.0
        %376 = vmatprep.subr.mxu0 0.0
        %377 = vmatpush2.msra.mxu0 0.0
        %378 = vmatprep.subr.mxu0 0.0
        %379 = vmatpush2.msra.mxu0 0.0
        %380 = vmatprep.subr.mxu0 0.0
        %381 = vmatpush2.msra.mxu0 0.0
        %382 = vmatprep.subr.mxu0 0.0
        %383 = vmatpush2.msra.mxu0 0.0
        %384 = vmatprep.subr.mxu0 0.0
        %385 = vmatpush2.msra.mxu0 0.0
        %386 = vmatprep.subr.mxu0 0.0
        %387 = vmatpush2.msra.mxu0 0.0
        %388 = vmatprep.subr.mxu0 0.0
        %389 = vmatpush2.msra.mxu0 0.0
        %390 = vmatprep.subr.mxu0 0.0
        %391 = vmatpush2.msra.mxu0 0.0
        %392 = vmatprep.subr.mxu0 0.0
        %393 = vmatpush2.msra.mxu0 0.0
        %394 = vmatprep.subr.mxu0 0.0
        %395 = vmatpush2.msra.mxu0 0.0
        %396 = vmatprep.subr.mxu0 0.0
        %397 = vmatpush2.msra.mxu0 0.0
        %398 = vmatprep.subr.mxu0 0.0
        %399 = vmatpush2.msra.mxu0 0.0
        %400 = vmatprep.mubr.f32.mxu0 0.0
        %401 = vmatmul.mubr.f32.gmra.mxu0 %v334
        %v402 = vpop.f32.mrf.mxu0
        %v403 = vadd.f32 %v330, %v402
        %v404 = vpop.f32.mrf.mxu0
        %405 = vdwg.mxu0
        %v406 = vld [vmem:[%s322] sm:$0x1]
        %v408 = vlaneseq
        %v409 = vshrl.u32 %v408, 7
        %v410 = vsub.s32 0, %v409
        %v411 = vrot.slane %v406, %v410
        %v413 = vadd.f32 %v403, %v411
        %v414 = vmin.f32 %v413, 0.0
        %v415 = vpack.c.bf16 %v414, %v414
        %v417 = vmul.bf16 %v415, 1069105081
        %v418 = vpow.bf16.pop %v417
        %419 = vst [vmem:[%s302] sm:$0xf] %v418
        %s420 = sand.u32 %s164, 1
        %s421 = scalar_lea.sflag [#allocation4], %s420
        %s422 = sand.u32 %s164, 1
        %s423 = smul.addr %s422, 4
        %s424 = scalar_lea.vmem [#allocation5], %s423
        // Predicated region
        $region41: #{tpu_custom_call.1} parent=35 // pred_check
          %p425 = pneg %p174
        $region42: #{tpu_custom_call.1} parent=35 // pred_check_branch
          %427 = sbr.rel (%p425) target = $region44
        $region43: #{tpu_custom_call.1} parent=35 // pred_region
          %s429 = ssub.s32 64, 64
          %430 = vsyncadd %s421, %s429
          %s431 = sadd.s32 %s28, %s27
          %s432 = sadd.s32 %s431, %s26
          %s433 = smul.addr %s432, 64
          %s434 = scalar_lea.hbm %s4, %s433
          %s436 = sshll.u32 %s424, 4
          %s437 = int_to_ptr.vmem [resolvable:$true] %s436
          %439 = dma.vmem_to_hbm [thread:$0]  %s437, 64, %s434, %s421
        $region44: #{tpu_custom_call.1} parent=35 // pred_fallthru
          _
      $region36: #{tpu_custom_call.1} parent=5 // pred_fallthru
        _
      %p440 = scmp.le.s32.totalorder 2, %s16
      // Predicated region
      $region45: #{tpu_custom_call.1} parent=5 // pred_check
        %p441 = pneg %p440
      $region46: #{tpu_custom_call.1} parent=5 // pred_check_branch
        %443 = sbr.rel (%p441) target = $region48
      $region47: #{tpu_custom_call.1} parent=5 // pred_region
        %s444 = ssub.s32 %s16, 2
        // Predicated region
        $region49: #{tpu_custom_call.1} parent=47 // pred_check
          %p445 = pneg %p180
        $region50: #{tpu_custom_call.1} parent=47 // pred_check_branch
          %447 = sbr.rel (%p445) target = $region52
        $region51: #{tpu_custom_call.1} parent=47 // pred_region
          %s448 = sand.u32 %s165, 1
          %s449 = scalar_lea.sflag [#allocation4], %s448
          %s450 = sand.u32 %s165, 1
          %s451 = smul.addr %s450, 4
          %s452 = scalar_lea.vmem [#allocation5], %s451
          %453 = dma.done %s449, 64
        $region52: #{tpu_custom_call.1} parent=47 // pred_fallthru
          _
      $region48: #{tpu_custom_call.1} parent=5 // pred_fallthru
        _
    $region6: #{tpu_custom_call.1} parent=1 // loop_footer
      %s20 = sadd.s32 1, %s16
    $region7: #{tpu_custom_call.1} parent=1 // loop_footer_branch
      %15 = sbr.rel target = $region3
    $region8: #{tpu_custom_call.1} parent=1 // loop_exit
      _
    %454 = vsyncpa [#allocation3], 1
    %s455 = scalar_lea.sflag [#allocation3], 1
    %456 = vsyncpa %s455, 1
    %457 = vsyncpa [#allocation4], 1
    %s458 = scalar_lea.sflag [#allocation4], 1
    %459 = vsyncpa %s458, 1

</llo_original>
